<compile_context>
chip_gen: v5e
topology: v5e:2x2
jax: 0.10.0
libtpu: 0.0.40
codegen_flags: <defaults>
</compile_context>

<pallas_src>
import functools

import jax
import jax.numpy as jnp
from jax import lax
from jax.experimental import pallas as pl
from jax.experimental.pallas import tpu as pltpu


_COMPUTE_DTYPE = jnp.bfloat16          # MXU-native operands; accumulation stays f32


def _round_up(x, m):
    return ((x + m - 1) // m) * m


def _pick_tile(dim, target, align):
    """Largest tile <= target that divides `dim` and is `align`-aligned.

    Falls back to the full dimension, which is always a legal TPU block."""
    if dim <= target:
        return dim
    t = (min(dim, target) // align) * align
    while t >= align:
        if dim % t == 0:
            return t
        t -= align
    return dim


@functools.lru_cache(maxsize=None)
def _vmem_limit_bytes():
    """Per-generation scoped-VMEM limit (128-MiB parts get ~100 MiB, v7x 48 MiB)."""
    try:
        cap = int(pltpu.get_tpu_info().vmem_capacity_bytes)
    except Exception:
        cap = 64 * 1024 * 1024
    if cap >= 128 * 1024 * 1024:
        return 100 * 1024 * 1024       # v5e / v6e: leave headroom under 128 MiB
    return 48 * 1024 * 1024            # v7x: stay well under 64 MiB physical


@functools.lru_cache(maxsize=None)
def _bf16_exp_ok():
    """bf16 EUP exists on v6e/v7x only; keep f32 exp elsewhere (v5e and older)."""
    try:
        kind = jax.devices()[0].device_kind.lower()
    except Exception:
        return False
    return ("v6" in kind) or ("v7" in kind)


# ----------------------------------------------------------------------------
# Kernel 1: tiled dense (linear) layer  y = x @ W + b
#   grid = (M/tm, N/tn, K/tk); f32 accumulator scratch persists over the
#   (arbitrary) K axis; bias folded into the k==0 accumulator init.
# ----------------------------------------------------------------------------
def _linear_kernel(x_ref, w_ref, b_ref, o_ref, acc_ref, *, n_k):
    k = pl.program_id(2)

    @pl.when(k == 0)
    def _():
        acc_ref[...] = jnp.broadcast_to(b_ref[...], acc_ref.shape)

    acc_ref[...] += jnp.dot(x_ref[...], w_ref[...],
                            preferred_element_type=jnp.float32)

    @pl.when(k == n_k - 1)
    def _():
        o_ref[...] = acc_ref[...].astype(o_ref.dtype)


def linear(x2d, w, b, *, out_dtype, compute_dtype=_COMPUTE_DTYPE):
    """x2d: (M, K), w: (K, N), b: (N,) or (1, N) -> (M, N) in out_dtype."""
    M, K = x2d.shape
    Kw, N = w.shape
    assert K == Kw

    xc = x2d.astype(compute_dtype)         # no-op if caller pre-cast
    wc = w.astype(compute_dtype)           # no-op if params prepared once
    bc = b.astype(jnp.float32).reshape(1, N)

    # ViT-base friendly targets: 512 | (B*256), 768 | 768 and 768 | 2304.
    tm = _pick_tile(M, 512, 8)
    tn = _pick_tile(N, 768, 128)
    tk = _pick_tile(K, 768, 128)
    grid = (M // tm, N // tn, K // tk)

    return pl.pallas_call(
        functools.partial(_linear_kernel, n_k=grid[2]),
        out_shape=jax.ShapeDtypeStruct((M, N), out_dtype),
        grid=grid,
        in_specs=[
            pl.BlockSpec((tm, tk), lambda i, j, k: (i, k)),
            pl.BlockSpec((tk, tn), lambda i, j, k: (k, j)),
            pl.BlockSpec((1, tn), lambda i, j, k: (0, j)),
        ],
        out_specs=pl.BlockSpec((tm, tn), lambda i, j, k: (i, j)),
        scratch_shapes=[pltpu.VMEM((tm, tn), jnp.float32)],
        compiler_params=pltpu.CompilerParams(
            dimension_semantics=("parallel", "parallel", "arbitrary"),
            vmem_limit_bytes=_vmem_limit_bytes()),
    )(xc, wc, bc)


# ----------------------------------------------------------------------------
# Kernel 2: multi-head attention.
#   src_ref: (N_pad, 3C) fused [q|k|v] slab (with_qkv=True), or (N_pad, C)
#   shared slab with q=k=v (with_qkv=False). One query tile (tq rows) per
#   grid step; heads are an unrolled in-kernel loop, each head writes its
#   (tq, D) result directly into the VMEM-resident (tq, C) output block.
# ----------------------------------------------------------------------------
def _mha_kernel(src_ref, o_ref, *, num_heads, scale, n_valid, tq, fused,
                exp_dtype):
    n_pad, width = src_ref.shape
    c = width // 3 if fused else width
    d = c // num_heads
    k_base = c if fused else 0
    v_base = 2 * c if fused else 0
    f32 = jnp.float32

    q_start = pl.multiple_of(pl.program_id(1) * tq, tq)

    mask_needed = n_valid < n_pad            # static (padding known at trace time)
    if mask_needed:
        key_ids = lax.broadcasted_iota(jnp.int32, (1, n_pad), 1)
        key_mask = key_ids < n_valid         # hoisted out of the head loop

    for h in range(num_heads):               # unrolled; Mosaic back-to-backs pushes
        lo = h * d
        hi = lo + d

        q_h = src_ref[pl.ds(q_start, tq), lo:hi]                 # (tq, D)
        q_h = (q_h.astype(f32) * scale).astype(q_h.dtype)        # scale per head
        k_h = src_ref[:, k_base + lo:k_base + hi]                # (N_pad, D)
        v_h = src_ref[:, v_base + lo:v_base + hi]                # (N_pad, D)

        # q_h @ k_h^T without an explicit transpose: contract the last dims.
        s = lax.dot_general(q_h, k_h, (((1,), (1,)), ((), ())),
                            preferred_element_type=f32)          # (tq, N_pad) f32
        if mask_needed:
            s = jnp.where(key_mask, s, -1e30)
        s = s - jnp.max(s, axis=-1, keepdims=True)
        p = jnp.exp(s.astype(exp_dtype))                         # bf16 exp on v6e/v7x
        denom = jnp.sum(p, axis=-1, keepdims=True, dtype=f32)

        o_h = jnp.dot(p.astype(v_h.dtype), v_h,
                      preferred_element_type=f32)                # (tq, D) f32
        # Normalize AFTER the PV matmul: (tq, D) multiplies instead of (tq, N).
        o_h = o_h * pl.reciprocal(denom, approx=True)
        o_ref[:, lo:hi] = o_h.astype(o_ref.dtype)                # VMEM-resident store


def mha_attention(src, *, num_heads, scale, n_valid, fused, out_dtype,
                  exp_dtype=None):
    """src: (B, N_pad, 3C) fused qkv slab, or (B, N_pad, C) shared (q=k=v)."""
    B, n_pad, width = src.shape
    C = width // 3 if fused else width
    if exp_dtype is None:
        exp_dtype = jnp.bfloat16 if _bf16_exp_ok() else jnp.float32

    tq = _pick_tile(n_pad, 128, 8)           # query tiling: >=2 steps at big N
    grid = (B, n_pad // tq)

    kernel = functools.partial(
        _mha_kernel, num_heads=num_heads, scale=scale, n_valid=n_valid,
        tq=tq, fused=fused, exp_dtype=exp_dtype)

    return pl.pallas_call(
        kernel,
        out_shape=jax.ShapeDtypeStruct((B, n_pad, C), out_dtype),
        grid=grid,
        # One contiguous (N_pad, width) slab per batch element (single DMA);
        # the block index does not change over the query axis, so it stays
        # resident in VMEM across query tiles.
        in_specs=[pl.BlockSpec((None, n_pad, width), lambda b, qi: (b, 0, 0))],
        out_specs=pl.BlockSpec((None, tq, C), lambda b, qi: (b, qi, 0)),
        compiler_params=pltpu.CompilerParams(
            dimension_semantics=("parallel", "parallel"),
            vmem_limit_bytes=_vmem_limit_bytes()),
    )(src)


# ----------------------------------------------------------------------------
# Full Attention.forward
# ----------------------------------------------------------------------------
def prepare_params(params, compute_dtype=_COMPUTE_DTYPE):
    """Pre-cast weights to the compute dtype once (param-load time)."""
    out = {}
    for k, v in params.items():
        if k.startswith("w_"):
            out[k] = v.astype(compute_dtype)
        else:
            out[k] = v.astype(jnp.float32)
    return out


def attention_forward(x, params, *, num_heads, with_qkv=True, qk_scale=None,
                      compute_dtype=_COMPUTE_DTYPE, exp_dtype=None):
    B, N, C = x.shape
    head_dim = C // num_heads
    scale = qk_scale if qk_scale is not None else head_dim ** (-0.5)
    if exp_dtype is None:
        exp_dtype = jnp.bfloat16 if _bf16_exp_ok() else jnp.float32

    # Pad the token count once (197 -> 256 for real ViT-base) so the GEMMs
    # tile on 8-aligned M and the attention key axis is lane-friendly; padded
    # keys are masked inside the MHA kernel, padded rows sliced off at the end.
    n_pad = _round_up(N, 128) if N >= 128 else _round_up(N, 8)
    xc = x.astype(compute_dtype)
    if n_pad != N:
        xc = jnp.pad(xc, ((0, 0), (0, n_pad - N), (0, 0)))

    if with_qkv:
        # qkv projection: (B*N_pad, C) @ (C, 3C) + bias, kept in compute dtype.
        qkv = linear(xc.reshape(B * n_pad, C), params["w_qkv"], params["b_qkv"],
                     out_dtype=compute_dtype, compute_dtype=compute_dtype)
        qkv = qkv.reshape(B, n_pad, 3 * C)           # free reshape, no transpose
        o = mha_attention(qkv, num_heads=num_heads, scale=scale, n_valid=N,
                          fused=True, out_dtype=compute_dtype,
                          exp_dtype=exp_dtype)
        o = linear(o.reshape(B * n_pad, C), params["w_proj"], params["b_proj"],
                   out_dtype=x.dtype, compute_dtype=compute_dtype)
        o = o.reshape(B, n_pad, C)
    else:
        o = mha_attention(xc, num_heads=num_heads, scale=scale, n_valid=N,
                          fused=False, out_dtype=x.dtype, exp_dtype=exp_dtype)

    return o[:, :N, :] if n_pad != N else o


# ----------------------------------------------------------------------------
# Pure-JAX references (for correctness checks)
# ----------------------------------------------------------------------------
def attention_reference_f32(x, params, *, num_heads, with_qkv=True, qk_scale=None):
    """Faithful f32 version of the PyTorch module."""
    B, N, C = x.shape
    D = C // num_heads
    scale = qk_scale if qk_scale is not None else D ** (-0.5)
    if with_qkv:
        w_qkv = params["w_qkv"].astype(jnp.float32)
        w_proj = params["w_proj"].astype(jnp.float32)
        qkv = x.reshape(B * N, C) @ w_qkv + params["b_qkv"].reshape(1, -1)
        qkv = qkv.reshape(B, N, 3, num_heads, D)
        qkv = jnp.transpose(qkv, (2, 0, 3, 1, 4))
        q, k, v = qkv[0], qkv[1], qkv[2]
    else:
        q = k = v = jnp.transpose(x.reshape(B, N, num_heads, D), (0, 2, 1, 3))
    s = jnp.einsum("bhqd,bhkd->bhqk", q, k) * scale
    p = jax.nn.softmax(s, axis=-1)
    o = jnp.einsum("bhqk,bhkd->bhqd", p, v)
    o = jnp.transpose(o, (0, 2, 1, 3)).reshape(B, N, C)
    if with_qkv:
        o = (o.reshape(B * N, C) @ w_proj
             + params["b_proj"].reshape(1, -1)).reshape(B, N, C)
    return o


def attention_reference_mixed(x, params, *, num_heads, with_qkv=True,
                              qk_scale=None, compute_dtype=_COMPUTE_DTYPE,
                              exp_dtype=jnp.float32):
    """Mirrors the kernel's mixed-precision policy (bf16 operands, f32 accum)."""
    B, N, C = x.shape
    D = C // num_heads
    scale = qk_scale if qk_scale is not None else D ** (-0.5)
    f32 = jnp.float32

    def lin(a, w, b, out_dtype):
        y = jnp.dot(a.astype(compute_dtype), w.astype(compute_dtype),
                    preferred_element_type=f32) + b.astype(f32).reshape(1, -1)
        return y.astype(out_dtype)

    if with_qkv:
        qkv = lin(x.reshape(B * N, C), params["w_qkv"], params["b_qkv"],
                  compute_dtype)
        qkv = qkv.reshape(B, N, 3, num_heads, D)
        qkv = jnp.transpose(qkv, (2, 0, 3, 1, 4))
        q, k, v = qkv[0], qkv[1], qkv[2]
    else:
        q = k = v = jnp.transpose(
            x.astype(compute_dtype).reshape(B, N, num_heads, D), (0, 2, 1, 3))
    qs = (q.astype(f32) * scale).astype(compute_dtype)
    s = jnp.einsum("bhqd,bhkd->bhqk", qs, k, preferred_element_type=f32)
    s = s - jnp.max(s, axis=-1, keepdims=True)
    p = jnp.exp(s.astype(exp_dtype))
    denom = jnp.sum(p, axis=-1, keepdims=True, dtype=f32)
    o = jnp.einsum("bhqk,bhkd->bhqd", p.astype(compute_dtype), v,
                   preferred_element_type=f32) / denom
    o = jnp.transpose(o, (0, 2, 1, 3)).reshape(B, N, C).astype(compute_dtype)
    if with_qkv:
        o = lin(o.reshape(B * N, C), params["w_proj"], params["b_proj"],
                x.dtype).reshape(B, N, C)
    else:
        o = o.astype(x.dtype)
    return o


if __name__ == "__main__":
    def run_case(B, N, C, num_heads, qkv_bias, with_qkv, seed):
        key = jax.random.PRNGKey(seed)
        kx, kw1, kb1, kw2, kb2 = jax.random.split(key, 5)
        x = jax.random.normal(kx, (B, N, C), dtype=jnp.float32)
        raw_params = {
            # nn.Linear(dim, 3*dim, bias=qkv_bias), stored as (C, 3C): y = x @ W
            "w_qkv": jax.random.normal(kw1, (C, 3 * C), jnp.float32) * (C ** -0.5),
            "b_qkv": (jax.random.normal(kb1, (3 * C,), jnp.float32) * 0.02
                      if qkv_bias else jnp.zeros((3 * C,), jnp.float32)),
            # nn.Linear(dim, dim) (has bias)
            "w_proj": jax.random.normal(kw2, (C, C), jnp.float32) * (C ** -0.5),
            "b_proj": jax.random.normal(kb2, (C,), jnp.float32) * 0.02,
        }
        params = prepare_params(raw_params)      # weights pre-cast to bf16 once
        exp_dtype = jnp.bfloat16 if _bf16_exp_ok() else jnp.float32

        out = attention_forward(x, params, num_heads=num_heads,
                                with_qkv=with_qkv, exp_dtype=exp_dtype)
        out = jax.block_until_ready(out)
        assert out.shape == (B, N, C)

        ref_mp = attention_reference_mixed(x, raw_params, num_heads=num_heads,
                                           with_qkv=with_qkv, exp_dtype=exp_dtype)
        ref_f32 = attention_reference_f32(x, raw_params, num_heads=num_heads,
                                          with_qkv=with_qkv)
        assert jnp.allclose(out.astype(jnp.float32), ref_mp.astype(jnp.float32),
                            atol=3e-2, rtol=3e-2), \
            "mismatch vs mixed-precision reference"
        assert jnp.allclose(out.astype(jnp.float32), ref_f32,
                            atol=1.5e-1, rtol=1.5e-1), \
            "mismatch vs f32 reference"

    # ViT-base uses qkv_bias=True.
    # Case 1: divisible shapes, fused qkv slab, single query tile.
    run_case(B=2, N=16, C=128, num_heads=4, qkv_bias=True, with_qkv=True, seed=0)
    # Case 2: non-divisible token count -> padded to 256, two 128-row query
    # tiles and -1e30 key masking exercised (mirrors real ViT N=197 handling).
    run_case(B=2, N=150, C=128, num_heads=4, qkv_bias=True, with_qkv=True, seed=1)
    # Case 3: with_qkv=False path (shared q=k=v slab, no projections).
    run_case(B=2, N=16, C=64, num_heads=2, qkv_bias=False, with_qkv=False, seed=2)

    print("KERNEL_OK")
</pallas_src>

<mosaic_0001>
module attributes {stable_mosaic.version = 11 : i64} {
  func.func @_linear_kernel(%arg0: i32, %arg1: i32, %arg2: i32, %arg3: memref<32x128xbf16, #tpu.memory_space<vmem>>, %arg4: memref<128x384xbf16, #tpu.memory_space<vmem>>, %arg5: memref<1x384xf32, #tpu.memory_space<vmem>>, %arg6: memref<32x384xbf16, #tpu.memory_space<vmem>>, %arg7: memref<32x384xf32, #tpu.memory_space<vmem>>) attributes {dimension_semantics = [#tpu.dimension_semantics<parallel>, #tpu.dimension_semantics<parallel>, #tpu.dimension_semantics<arbitrary>], iteration_bounds = array<i64: 1, 1, 1>, scalar_prefetch = 0 : i64, scratch_operands = 1 : i64, tpu.core_type = #tpu.core_type<tc>, window_params = [{transform_indices = @transform_0, window_bounds = array<i64: 32, 128>}, {transform_indices = @transform_1, window_bounds = array<i64: 128, 384>}, {transform_indices = @transform_2, window_bounds = array<i64: 1, 384>}, {transform_indices = @transform_3, window_bounds = array<i64: 32, 384>}]} {
    %c0_i32 = arith.constant 0 : i32
    %0 = arith.cmpi eq, %arg2, %c0_i32 : i32
    %1 = arith.extui %0 : i1 to i32
    %c0_i32_0 = arith.constant 0 : i32
    %2 = arith.cmpi ne, %1, %c0_i32_0 : i32
    scf.if %2 {
      %c0_10 = arith.constant 0 : index
      %c0_11 = arith.constant 0 : index
      %12 = vector.load %arg5[%c0_10, %c0_11] : memref<1x384xf32, #tpu.memory_space<vmem>>, vector<1x384xf32>
      %13 = vector.shape_cast %12 : vector<1x384xf32> to vector<1x384xf32>
      %14 = vector.broadcast %13 : vector<1x384xf32> to vector<32x384xf32>
      %c0_12 = arith.constant 0 : index
      %c0_13 = arith.constant 0 : index
      %15 = vector.load %arg7[%c0_12, %c0_13] : memref<32x384xf32, #tpu.memory_space<vmem>>, vector<32x384xf32>
      tpu.vector_store %arg7[%c0_12, %c0_13], %14 {strides = array<i32>} : memref<32x384xf32, #tpu.memory_space<vmem>>, vector<32x384xf32>,
    } else {
    }
    %c0 = arith.constant 0 : index
    %c0_1 = arith.constant 0 : index
    %3 = vector.load %arg7[%c0, %c0_1] : memref<32x384xf32, #tpu.memory_space<vmem>>, vector<32x384xf32>
    %c0_2 = arith.constant 0 : index
    %c0_3 = arith.constant 0 : index
    %4 = vector.load %arg3[%c0_2, %c0_3] : memref<32x128xbf16, #tpu.memory_space<vmem>>, vector<32x128xbf16>
    %c0_4 = arith.constant 0 : index
    %c0_5 = arith.constant 0 : index
    %5 = vector.load %arg4[%c0_4, %c0_5] : memref<128x384xbf16, #tpu.memory_space<vmem>>, vector<128x384xbf16>
    %cst = arith.constant dense<0.000000e+00> : vector<32x384xf32>
    %6 = tpu.matmul %4, %5, %cst {dimension_numbers = #tpu.dot_dimension_numbers<[1], [0], [0], [1], [0, 0, 1, 1], [], []>} : vector<32x128xbf16>, vector<128x384xbf16>, vector<32x384xf32> -> vector<32x384xf32>
    %7 = arith.addf %3, %6 : vector<32x384xf32>
    %c0_6 = arith.constant 0 : index
    %c0_7 = arith.constant 0 : index
    %8 = vector.load %arg7[%c0_6, %c0_7] : memref<32x384xf32, #tpu.memory_space<vmem>>, vector<32x384xf32>
    tpu.vector_store %arg7[%c0_6, %c0_7], %7 {strides = array<i32>} : memref<32x384xf32, #tpu.memory_space<vmem>>, vector<32x384xf32>,
    %c0_i32_8 = arith.constant 0 : i32
    %9 = arith.cmpi eq, %arg2, %c0_i32_8 : i32
    %10 = arith.extui %9 : i1 to i32
    %c0_i32_9 = arith.constant 0 : i32
    %11 = arith.cmpi ne, %10, %c0_i32_9 : i32
    scf.if %11 {
      %c0_10 = arith.constant 0 : index
      %c0_11 = arith.constant 0 : index
      %12 = vector.load %arg7[%c0_10, %c0_11] : memref<32x384xf32, #tpu.memory_space<vmem>>, vector<32x384xf32>
      %13 = arith.truncf %12 : vector<32x384xf32> to vector<32x384xbf16>
      %c0_12 = arith.constant 0 : index
      %c0_13 = arith.constant 0 : index
      %14 = vector.load %arg6[%c0_12, %c0_13] : memref<32x384xbf16, #tpu.memory_space<vmem>>, vector<32x384xbf16>
      tpu.vector_store %arg6[%c0_12, %c0_13], %13 {strides = array<i32>} : memref<32x384xbf16, #tpu.memory_space<vmem>>, vector<32x384xbf16>,
    } else {
    }
    return
  }
  func.func @transform_0(%arg0: i32, %arg1: i32, %arg2: i32) -> (i32, i32) {
    %c0_i32 = arith.constant 0 : i32
    return %arg0, %arg2 : i32, i32
  }
  func.func @transform_1(%arg0: i32, %arg1: i32, %arg2: i32) -> (i32, i32) {
    %c0_i32 = arith.constant 0 : i32
    return %arg2, %arg1 : i32, i32
  }
  func.func @transform_2(%arg0: i32, %arg1: i32, %arg2: i32) -> (i32, i32) {
    %c0_i32 = arith.constant 0 : i32
    %c0_i32_0 = arith.constant 0 : i32
    return %c0_i32, %arg1 : i32, i32
  }
  func.func @transform_3(%arg0: i32, %arg1: i32, %arg2: i32) -> (i32, i32) {
    %c0_i32 = arith.constant 0 : i32
    return %arg0, %arg1 : i32, i32
  }
}

</mosaic_0001>

<llo_original>
// kernel: tpu_custom_call.1
$region0: #{tpu_custom_call.1}
  #allocation0 [shape = 'u32[]', space=smem, size = 0x4, offset = 0x4, fixed_abs, tag = 'smem constant byte address 0x4 - core index']
  #allocation1 [shape = 'u32[72,128]{1,0:T(1,128)}', space=vmem, size = 0x9000, scoped, tag = 'internal scratch']
  #allocation2 [shape = 'f32[32,384]{1,0:T(8,128)}', space=vmem, size = 0xc000, scoped, tag = 'scratch operand']
  %s0 = inlined_call_operand.hbm [shape: bf16[32,128], index: 0, kind: input, shape index: {}]
  %s1 = inlined_call_operand.hbm [shape: bf16[128,384], index: 1, kind: input, shape index: {}]
  %s2 = inlined_call_operand.hbm [shape: f32[1,384], index: 2, kind: input, shape index: {}]
  %s3 = inlined_call_operand.hbm [shape: bf16[32,384], index: 3, kind: output, shape index: {}]
  %s4 = sld [smem:[#allocation0]]
  $region42: #{tpu_custom_call.1} parent=0
    _
  %s6 = ssub.s32 1, %s4
  %s7 = scalar_select 0, %s6, %s4
  $region1: #{tpu_custom_call.1} parent=0
    #allocation3 [shape = 'u8[8192]{0}', space=vmem, size = 0x2000, scoped, tag = 'input window, operand 0, single buffered']
    #allocation4 [shape = 's32[1]{0}', space=sflag, size = 0x4, scoped, tag = 'scoped memory for tpu_custom_call.1']
    #allocation5 [shape = 's32[1]{0}', space=sflag, size = 0x4, scoped, tag = 'scoped memory for tpu_custom_call.1']
    #allocation6 [shape = 'u8[98304]{0}', space=vmem, size = 0x18000, scoped, tag = 'input window, operand 1, single buffered']
    #allocation7 [shape = 's32[1]{0}', space=sflag, size = 0x4, scoped, tag = 'scoped memory for tpu_custom_call.1']
    #allocation8 [shape = 'u8[1536]{0}', space=vmem, size = 0x800, scoped, tag = 'input window, operand 2, single buffered']
    #allocation9 [shape = 'u8[24576]{0}', space=vmem, size = 0x6000, scoped, tag = 'output window, operand 0, single buffered']
    %8 = vsyncpa [#allocation4], 0
    %9 = vsyncpa [#allocation7], 0
    %10 = vsyncpa [#allocation5], 0
    // Predicated region
    $region2: #{tpu_custom_call.1} parent=1 // pred_check
      _
    $region3: #{tpu_custom_call.1} parent=1 // pred_check_branch
      %12 = sbr.rel (0) target = $region5
    $region4: #{tpu_custom_call.1} parent=1 // pred_region
      %14 = vsyncadd [#allocation4], 0
      %s15 = sshll.u32 %s0, 4
      %s16 = int_to_ptr.hbm [resolvable:$true] %s15
      %s17 = sshll.u32 [#allocation3], 4
      %s18 = int_to_ptr.vmem [resolvable:$true] %s17
      %23 = dma.hbm_to_vmem [thread:$0]  %s16, 256, %s18, [#allocation4], 64, 64, 4
    $region5: #{tpu_custom_call.1} parent=1 // pred_fallthru
      _
    // Predicated region
    $region6: #{tpu_custom_call.1} parent=1 // pred_check
      _
    $region7: #{tpu_custom_call.1} parent=1 // pred_check_branch
      %25 = sbr.rel (0) target = $region9
    $region8: #{tpu_custom_call.1} parent=1 // pred_region
      %27 = vsyncadd [#allocation7], 0
      %s28 = sshll.u32 %s1, 4
      %s29 = int_to_ptr.hbm [resolvable:$true] %s28
      %s30 = sshll.u32 [#allocation6], 4
      %s31 = int_to_ptr.vmem [resolvable:$true] %s30
      %36 = dma.hbm_to_vmem [thread:$0]  %s29, 3072, %s31, [#allocation7], 192, 192, 12
    $region9: #{tpu_custom_call.1} parent=1 // pred_fallthru
      _
    // Predicated region
    $region10: #{tpu_custom_call.1} parent=1 // pred_check
      _
    $region11: #{tpu_custom_call.1} parent=1 // pred_check_branch
      %38 = sbr.rel (0) target = $region13
    $region12: #{tpu_custom_call.1} parent=1 // pred_region
      %40 = vsyncadd [#allocation7], 0
      %s42 = sshll.u32 %s2, 4
      %s43 = int_to_ptr.hbm [resolvable:$true] %s42
      %s44 = sshll.u32 [#allocation8], 4
      %s45 = int_to_ptr.vmem [resolvable:$true] %s44
      %47 = dma.hbm_to_vmem [thread:$0]  %s43, 48, %s45, [#allocation7]
    $region13: #{tpu_custom_call.1} parent=1 // pred_fallthru
      _
    // Predicated region
    $region14: #{tpu_custom_call.1} parent=1 // pred_check
      _
    $region15: #{tpu_custom_call.1} parent=1 // pred_check_branch
      %49 = sbr.rel (0) target = $region17
    $region16: #{tpu_custom_call.1} parent=1 // pred_region
      %51 = dma.done [#allocation4], 256
    $region17: #{tpu_custom_call.1} parent=1 // pred_fallthru
      _
    // Predicated region
    $region18: #{tpu_custom_call.1} parent=1 // pred_check
      _
    $region19: #{tpu_custom_call.1} parent=1 // pred_check_branch
      %53 = sbr.rel (0) target = $region21
    $region20: #{tpu_custom_call.1} parent=1 // pred_region
      %55 = dma.done [#allocation7], 3072
    $region21: #{tpu_custom_call.1} parent=1 // pred_fallthru
      _
    // Predicated region
    $region22: #{tpu_custom_call.1} parent=1 // pred_check
      _
    $region23: #{tpu_custom_call.1} parent=1 // pred_check_branch
      %57 = sbr.rel (0) target = $region25
    $region24: #{tpu_custom_call.1} parent=1 // pred_region
      %59 = dma.done [#allocation7], 48
    $region25: #{tpu_custom_call.1} parent=1 // pred_fallthru
      _
    %p60 = scmp.eq.s32.totalorder 0, 0
    // Predicated region
    $region26: #{tpu_custom_call.1} parent=1 // pred_check
      %p61 = pneg %p60
    $region27: #{tpu_custom_call.1} parent=1 // pred_check_branch
      %63 = sbr.rel (%p61) target = $region29
    $region28: #{tpu_custom_call.1} parent=1 // pred_region
      %v64 = vld [vmem:[#allocation8] sm:$0x7]
      %v66 = vperm.slane %v64, 0
      %v67 = vperm.slane %v64, 1
      %v68 = vperm.slane %v64, 2
      %72 = vst [vmem:[#allocation2] sm:$0xff] %v66
      %73 = vst [vmem:[#allocation2 + $0x8] sm:$0xff] %v67
      %74 = vst [vmem:[#allocation2 + $0x10] sm:$0xff] %v68
      %75 = vst [vmem:[#allocation2 + $0x18] sm:$0xff] %v66
      %76 = vst [vmem:[#allocation2 + $0x20] sm:$0xff] %v67
      %77 = vst [vmem:[#allocation2 + $0x28] sm:$0xff] %v68
      %78 = vst [vmem:[#allocation2 + $0x30] sm:$0xff] %v66
      %79 = vst [vmem:[#allocation2 + $0x38] sm:$0xff] %v67
      %80 = vst [vmem:[#allocation2 + $0x40] sm:$0xff] %v68
      %81 = vst [vmem:[#allocation2 + $0x48] sm:$0xff] %v66
      %82 = vst [vmem:[#allocation2 + $0x50] sm:$0xff] %v67
      %83 = vst [vmem:[#allocation2 + $0x58] sm:$0xff] %v68
    $region29: #{tpu_custom_call.1} parent=1 // pred_fallthru
      _
    %v84 = vld [vmem:[#allocation2] sm:$0xff]
    %v85 = vld [vmem:[#allocation2 + $0x8] sm:$0xff]
    %v86 = vld [vmem:[#allocation2 + $0x10] sm:$0xff]
    %v87 = vld [vmem:[#allocation2 + $0x18] sm:$0xff]
    %v88 = vld [vmem:[#allocation2 + $0x20] sm:$0xff]
    %v89 = vld [vmem:[#allocation2 + $0x28] sm:$0xff]
    %v90 = vld [vmem:[#allocation2 + $0x30] sm:$0xff]
    %v91 = vld [vmem:[#allocation2 + $0x38] sm:$0xff]
    %v92 = vld [vmem:[#allocation2 + $0x40] sm:$0xff]
    %v93 = vld [vmem:[#allocation2 + $0x48] sm:$0xff]
    %v94 = vld [vmem:[#allocation2 + $0x50] sm:$0xff]
    %v95 = vld [vmem:[#allocation2 + $0x58] sm:$0xff]
    %v96 = vld [vmem:[#allocation3] sm:$0xf]
    %v97 = vld [vmem:[#allocation3 + $0x4] sm:$0xf]
    %v98 = vld [vmem:[#allocation3 + $0x8] sm:$0xf]
    %v99 = vld [vmem:[#allocation3 + $0xc] sm:$0xf]
    %v100 = vld [vmem:[#allocation6] sm:$0xff]
    %v101 = vld [vmem:[#allocation6 + $0x8] sm:$0xf]
    %v102 = vld [vmem:[#allocation6 + $0xc] sm:$0xff]
    %v103 = vld [vmem:[#allocation6 + $0x14] sm:$0xf]
    %v104 = vld [vmem:[#allocation6 + $0x18] sm:$0xff]
    %v105 = vld [vmem:[#allocation6 + $0x20] sm:$0xf]
    %v106 = vld [vmem:[#allocation6 + $0x24] sm:$0xff]
    %v107 = vld [vmem:[#allocation6 + $0x2c] sm:$0xf]
    %v108 = vld [vmem:[#allocation6 + $0x30] sm:$0xff]
    %v109 = vld [vmem:[#allocation6 + $0x38] sm:$0xf]
    %v110 = vld [vmem:[#allocation6 + $0x3c] sm:$0xff]
    %v111 = vld [vmem:[#allocation6 + $0x44] sm:$0xf]
    %v112 = vld [vmem:[#allocation6 + $0x48] sm:$0xff]
    %v113 = vld [vmem:[#allocation6 + $0x50] sm:$0xf]
    %v114 = vld [vmem:[#allocation6 + $0x54] sm:$0xff]
    %v115 = vld [vmem:[#allocation6 + $0x5c] sm:$0xf]
    %v116 = vld [vmem:[#allocation6 + $0x60] sm:$0xff]
    %v117 = vld [vmem:[#allocation6 + $0x68] sm:$0xf]
    %v118 = vld [vmem:[#allocation6 + $0x6c] sm:$0xff]
    %v119 = vld [vmem:[#allocation6 + $0x74] sm:$0xf]
    %v120 = vld [vmem:[#allocation6 + $0x78] sm:$0xff]
    %v121 = vld [vmem:[#allocation6 + $0x80] sm:$0xf]
    %v122 = vld [vmem:[#allocation6 + $0x84] sm:$0xff]
    %v123 = vld [vmem:[#allocation6 + $0x8c] sm:$0xf]
    %v124 = vld [vmem:[#allocation6 + $0x90] sm:$0xff]
    %v125 = vld [vmem:[#allocation6 + $0x98] sm:$0xf]
    %v126 = vld [vmem:[#allocation6 + $0x9c] sm:$0xff]
    %v127 = vld [vmem:[#allocation6 + $0xa4] sm:$0xf]
    %v128 = vld [vmem:[#allocation6 + $0xa8] sm:$0xff]
    %v129 = vld [vmem:[#allocation6 + $0xb0] sm:$0xf]
    %v130 = vld [vmem:[#allocation6 + $0xb4] sm:$0xff]
    %v131 = vld [vmem:[#allocation6 + $0xbc] sm:$0xf]
    %v136 = vunpack.c.l.b16 %v96
    %v137 = vunpack.c.l.b16 %v97
    %v138 = vunpack.c.l.b16 %v98
    %v139 = vunpack.c.l.b16 %v99
    %v140 = vpack.c.b16 %v137, %v136
    %v141 = vpack.c.b16 %v139, %v138
    %v176 = vunpack.c.l.b16 %v100
    %v177 = vunpack.c.h.b16 %v100
    %v178 = vunpack.c.l.b16 %v101
    %v179 = vunpack.c.l.b16 %v102
    %v180 = vunpack.c.h.b16 %v102
    %v181 = vunpack.c.l.b16 %v103
    %v182 = vunpack.c.l.b16 %v104
    %v183 = vunpack.c.h.b16 %v104
    %v184 = vunpack.c.l.b16 %v105
    %v185 = vunpack.c.l.b16 %v106
    %v186 = vunpack.c.h.b16 %v106
    %v187 = vunpack.c.l.b16 %v107
    %v188 = vunpack.c.l.b16 %v108
    %v189 = vunpack.c.h.b16 %v108
    %v190 = vunpack.c.l.b16 %v109
    %v191 = vunpack.c.l.b16 %v110
    %v192 = vunpack.c.h.b16 %v110
    %v193 = vunpack.c.l.b16 %v111
    %v194 = vunpack.c.l.b16 %v112
    %v195 = vunpack.c.h.b16 %v112
    %v196 = vunpack.c.l.b16 %v113
    %v197 = vunpack.c.l.b16 %v114
    %v198 = vunpack.c.h.b16 %v114
    %v199 = vunpack.c.l.b16 %v115
    %v200 = vunpack.c.l.b16 %v116
    %v201 = vunpack.c.h.b16 %v116
    %v202 = vunpack.c.l.b16 %v117
    %v203 = vunpack.c.l.b16 %v118
    %v204 = vunpack.c.h.b16 %v118
    %v205 = vunpack.c.l.b16 %v119
    %v206 = vunpack.c.l.b16 %v120
    %v207 = vunpack.c.h.b16 %v120
    %v208 = vunpack.c.l.b16 %v121
    %v209 = vunpack.c.l.b16 %v122
    %v210 = vunpack.c.h.b16 %v122
    %v211 = vunpack.c.l.b16 %v123
    %v212 = vunpack.c.l.b16 %v124
    %v213 = vunpack.c.h.b16 %v124
    %v214 = vunpack.c.l.b16 %v125
    %v215 = vunpack.c.l.b16 %v126
    %v216 = vunpack.c.h.b16 %v126
    %v217 = vunpack.c.l.b16 %v127
    %v218 = vunpack.c.l.b16 %v128
    %v219 = vunpack.c.h.b16 %v128
    %v220 = vunpack.c.l.b16 %v129
    %v221 = vunpack.c.l.b16 %v130
    %v222 = vunpack.c.h.b16 %v130
    %v223 = vunpack.c.l.b16 %v131
    %v224 = vpack.c.b16 %v179, %v176
    %v225 = vpack.c.b16 %v180, %v177
    %v226 = vpack.c.b16 %v181, %v178
    %v227 = vpack.c.b16 %v185, %v182
    %v228 = vpack.c.b16 %v186, %v183
    %v229 = vpack.c.b16 %v187, %v184
    %v230 = vpack.c.b16 %v191, %v188
    %v231 = vpack.c.b16 %v192, %v189
    %v232 = vpack.c.b16 %v193, %v190
    %v233 = vpack.c.b16 %v197, %v194
    %v234 = vpack.c.b16 %v198, %v195
    %v235 = vpack.c.b16 %v199, %v196
    %v236 = vpack.c.b16 %v203, %v200
    %v237 = vpack.c.b16 %v204, %v201
    %v238 = vpack.c.b16 %v205, %v202
    %v239 = vpack.c.b16 %v209, %v206
    %v240 = vpack.c.b16 %v210, %v207
    %v241 = vpack.c.b16 %v211, %v208
    %v242 = vpack.c.b16 %v215, %v212
    %v243 = vpack.c.b16 %v216, %v213
    %v244 = vpack.c.b16 %v217, %v214
    %v245 = vpack.c.b16 %v221, %v218
    %v246 = vpack.c.b16 %v222, %v219
    %v247 = vpack.c.b16 %v223, %v220
    %272 = vmatpush.bf16.msra.mxu0 %v245
    %273 = vmatpush.bf16.msra.mxu0 %v242
    %274 = vmatpush.bf16.msra.mxu0 %v239
    %275 = vmatpush.bf16.msra.mxu0 %v236
    %276 = vmatpush.bf16.msra.mxu0 %v233
    %277 = vmatpush.bf16.msra.mxu0 %v230
    %278 = vmatpush.bf16.msra.mxu0 %v227
    %279 = vmatpush.bf16.msra.mxu0 %v224
    %280 = vmatmul.bf16.gmra.mxu0 %v140
    %v281 = vpop.f32.mrf.mxu0
    %v282 = vadd.f32 0.0, %v281
    %v283 = vpop.f32.mrf.mxu0
    %v284 = vadd.f32 0.0, %v283
    %285 = vmatmul.bf16.gmra.mxu0 %v141
    %v286 = vpop.f32.mrf.mxu0
    %v287 = vadd.f32 0.0, %v286
    %v288 = vpop.f32.mrf.mxu0
    %v289 = vadd.f32 0.0, %v288
    %290 = vdwg.mxu0
    %291 = vmatpush.bf16.msra.mxu0 %v246
    %292 = vmatpush.bf16.msra.mxu0 %v243
    %293 = vmatpush.bf16.msra.mxu0 %v240
    %294 = vmatpush.bf16.msra.mxu0 %v237
    %295 = vmatpush.bf16.msra.mxu0 %v234
    %296 = vmatpush.bf16.msra.mxu0 %v231
    %297 = vmatpush.bf16.msra.mxu0 %v228
    %298 = vmatpush.bf16.msra.mxu0 %v225
    %299 = vmatmul.bf16.gmra.mxu0 %v140
    %v300 = vpop.f32.mrf.mxu0
    %v301 = vadd.f32 0.0, %v300
    %v302 = vpop.f32.mrf.mxu0
    %v303 = vadd.f32 0.0, %v302
    %304 = vmatmul.bf16.gmra.mxu0 %v141
    %v305 = vpop.f32.mrf.mxu0
    %v306 = vadd.f32 0.0, %v305
    %v307 = vpop.f32.mrf.mxu0
    %v308 = vadd.f32 0.0, %v307
    %309 = vdwg.mxu0
    %310 = vmatpush.bf16.msra.mxu0 %v247
    %311 = vmatpush.bf16.msra.mxu0 %v244
    %312 = vmatpush.bf16.msra.mxu0 %v241
    %313 = vmatpush.bf16.msra.mxu0 %v238
    %314 = vmatpush.bf16.msra.mxu0 %v235
    %315 = vmatpush.bf16.msra.mxu0 %v232
    %316 = vmatpush.bf16.msra.mxu0 %v229
    %317 = vmatpush.bf16.msra.mxu0 %v226
    %318 = vmatmul.bf16.gmra.mxu0 %v140
    %v319 = vpop.f32.mrf.mxu0
    %v320 = vadd.f32 0.0, %v319
    %v321 = vpop.f32.mrf.mxu0
    %v322 = vadd.f32 0.0, %v321
    %323 = vmatmul.bf16.gmra.mxu0 %v141
    %v324 = vpop.f32.mrf.mxu0
    %v325 = vadd.f32 0.0, %v324
    %v326 = vpop.f32.mrf.mxu0
    %v327 = vadd.f32 0.0, %v326
    %328 = vdwg.mxu0
    %v329 = vadd.f32 %v84, %v282
    %v330 = vadd.f32 %v85, %v301
    %v331 = vadd.f32 %v86, %v320
    %v332 = vadd.f32 %v87, %v284
    %v333 = vadd.f32 %v88, %v303
    %v334 = vadd.f32 %v89, %v322
    %v335 = vadd.f32 %v90, %v287
    %v336 = vadd.f32 %v91, %v306
    %v337 = vadd.f32 %v92, %v325
    %v338 = vadd.f32 %v93, %v289
    %v339 = vadd.f32 %v94, %v308
    %v340 = vadd.f32 %v95, %v327
    %341 = vst [vmem:[#allocation2] sm:$0xff] %v329
    %342 = vst [vmem:[#allocation2 + $0x8] sm:$0xff] %v330
    %343 = vst [vmem:[#allocation2 + $0x10] sm:$0xff] %v331
    %344 = vst [vmem:[#allocation2 + $0x18] sm:$0xff] %v332
    %345 = vst [vmem:[#allocation2 + $0x20] sm:$0xff] %v333
    %346 = vst [vmem:[#allocation2 + $0x28] sm:$0xff] %v334
    %347 = vst [vmem:[#allocation2 + $0x30] sm:$0xff] %v335
    %348 = vst [vmem:[#allocation2 + $0x38] sm:$0xff] %v336
    %349 = vst [vmem:[#allocation2 + $0x40] sm:$0xff] %v337
    %350 = vst [vmem:[#allocation2 + $0x48] sm:$0xff] %v338
    %351 = vst [vmem:[#allocation2 + $0x50] sm:$0xff] %v339
    %352 = vst [vmem:[#allocation2 + $0x58] sm:$0xff] %v340
    // Predicated region
    $region30: #{tpu_custom_call.1} parent=1 // pred_check
      %p353 = pneg %p60
    $region31: #{tpu_custom_call.1} parent=1 // pred_check_branch
      %355 = sbr.rel (%p353) target = $region33
    $region32: #{tpu_custom_call.1} parent=1 // pred_region
      %v356 = vld [vmem:[#allocation2] sm:$0xff]
      %v357 = vld [vmem:[#allocation2 + $0x8] sm:$0xff]
      %v358 = vld [vmem:[#allocation2 + $0x10] sm:$0xff]
      %v359 = vld [vmem:[#allocation2 + $0x18] sm:$0xff]
      %v360 = vld [vmem:[#allocation2 + $0x20] sm:$0xff]
      %v361 = vld [vmem:[#allocation2 + $0x28] sm:$0xff]
      %v362 = vld [vmem:[#allocation2 + $0x30] sm:$0xff]
      %v363 = vld [vmem:[#allocation2 + $0x38] sm:$0xff]
      %v364 = vld [vmem:[#allocation2 + $0x40] sm:$0xff]
      %v365 = vld [vmem:[#allocation2 + $0x48] sm:$0xff]
      %v366 = vld [vmem:[#allocation2 + $0x50] sm:$0xff]
      %v367 = vld [vmem:[#allocation2 + $0x58] sm:$0xff]
      %v368 = vpack.c.bf16 %v357, %v356
      %v369 = vpack.c.bf16 %v358, %v358
      %v370 = vpack.c.bf16 %v360, %v359
      %v371 = vpack.c.bf16 %v361, %v361
      %v372 = vpack.c.bf16 %v363, %v362
      %v373 = vpack.c.bf16 %v364, %v364
      %v374 = vpack.c.bf16 %v366, %v365
      %v375 = vpack.c.bf16 %v367, %v367
      %376 = vst [vmem:[#allocation9] sm:$0xff] %v368
      %377 = vst [vmem:[#allocation9 + $0x8] sm:$0xf] %v369
      %378 = vst [vmem:[#allocation9 + $0xc] sm:$0xff] %v370
      %379 = vst [vmem:[#allocation9 + $0x14] sm:$0xf] %v371
      %380 = vst [vmem:[#allocation9 + $0x18] sm:$0xff] %v372
      %381 = vst [vmem:[#allocation9 + $0x20] sm:$0xf] %v373
      %382 = vst [vmem:[#allocation9 + $0x24] sm:$0xff] %v374
      %383 = vst [vmem:[#allocation9 + $0x2c] sm:$0xf] %v375
    $region33: #{tpu_custom_call.1} parent=1 // pred_fallthru
      _
    // Predicated region
    $region34: #{tpu_custom_call.1} parent=1 // pred_check
      _
    $region35: #{tpu_custom_call.1} parent=1 // pred_check_branch
      %385 = sbr.rel (0) target = $region37
    $region36: #{tpu_custom_call.1} parent=1 // pred_region
      %387 = vsyncadd [#allocation5], 0
      %s388 = sshll.u32 [#allocation9], 4
      %s389 = int_to_ptr.vmem [resolvable:$true] %s388
      %s390 = sshll.u32 %s3, 4
      %s391 = int_to_ptr.hbm [resolvable:$true] %s390
      %396 = dma.vmem_to_hbm [thread:$0]  %s389, 768, %s391, [#allocation5], 192, 192, 12
    $region37: #{tpu_custom_call.1} parent=1 // pred_fallthru
      _
    // Predicated region
    $region38: #{tpu_custom_call.1} parent=1 // pred_check
      _
    $region39: #{tpu_custom_call.1} parent=1 // pred_check_branch
      %398 = sbr.rel (0) target = $region41
    $region40: #{tpu_custom_call.1} parent=1 // pred_region
      %400 = dma.done [#allocation5], 768
    $region41: #{tpu_custom_call.1} parent=1 // pred_fallthru
      _
    %401 = vsyncpa [#allocation4], 1
    %402 = vsyncpa [#allocation7], 1
    %403 = vsyncpa [#allocation5], 1

</llo_original>
